<compile_context>
chip_gen: v7x
topology: tpu7x:2x2x1
jax: 0.10.0
libtpu: 0.0.40
codegen_flags: <defaults>
</compile_context>

<pallas_src>
import functools

import jax
import jax.numpy as jnp
from jax.experimental import pallas as pl
from jax.experimental.pallas import tpu as pltpu

KERNEL_SIZE = 3
BN_EPS = 1e-5

# MXU-operand / intermediate-activation storage dtype.  bf16 is the native MXU
# dtype on v5e/v6e/v7x (f32 matmul is multi-pass emulation) and halves the HBM
# traffic of the intermediate activation streams; accumulation, BatchNorm stats
# and all elementwise math stay f32 (v5e has no bf16 VPU/EUP).  Set to
# jnp.float32 for bit-exact PyTorch-f32 parity.
MXU_DTYPE = jnp.bfloat16
_ISZ = 2 if MXU_DTYPE == jnp.bfloat16 else 4
_SUBLANE = 16 if MXU_DTYPE == jnp.bfloat16 else 8   # sublane quantum of MXU_DTYPE


# ---------------------------------------------------------------------------
# In-kernel building blocks
# ---------------------------------------------------------------------------
def _conv3_replicate(h, w_stacked, seg_len):
    """3-tap conv along the lane axis with per-segment replicate padding.

    h:         (C, Ltot) activations; Ltot = B_blk * seg_len batch segments
               folded into the lane axis.
    w_stacked: (Co, 3C) weights, taps stacked [left(k=0), center(k=1),
               right(k=2)] along the contraction axis (matches the channel
               stacking below).

    The +-1 neighbours are static lane shifts (jnp.roll lowers to a two-slice
    lane concat -> same lane-rotate hardware path as pltpu.roll, and also runs
    under Pallas interpret mode).  A (1, Ltot) per-segment edge mask both
    implements replicate padding and stops taps leaking across batch segments.
    All three taps are contracted in ONE MXU matmul of depth 3C.
    """
    _, ltot = h.shape
    # (1, L) iota mask (not (C, L)): one vreg row, broadcast by the select.
    pos = jax.lax.broadcasted_iota(jnp.int32, (1, ltot), 1) % seg_len
    left = jnp.where(pos == 0, h, jnp.roll(h, 1, axis=1))               # h[:, i-1]
    right = jnp.where(pos == seg_len - 1, h, jnp.roll(h, -1, axis=1))   # h[:, i+1]
    h3 = jnp.concatenate([left, h, right], axis=0)                      # (3C, Ltot)
    # TODO(synk): on v7x, three MRB-accumulated K=C dots (acc += dot(w_k, tap_k))
    # would avoid materializing the (3C, Ltot) operand; keep the single K=3C dot
    # on v5e/v6e (one MXU fill/drain).
    return jnp.dot(w_stacked, h3, preferred_element_type=jnp.float32)


def _sum_m2(y):
    """Per-channel (sum, centered sum-of-squares) over the lane axis -> (C, 2).

    Centered per-block second moments are combined across grid steps with
    Chan's parallel-variance formula in the glue, avoiding the
    E[y^2] - mean^2 cancellation (perf-review correctness concern)."""
    cnt = y.shape[1]
    s = jnp.sum(y, axis=1, keepdims=True)
    mu = s * (1.0 / cnt)
    d = y - mu
    m2 = jnp.sum(d * d, axis=1, keepdims=True)
    # (C, 2) store has lane width 2 (masked vst); transposing to a lane-major
    # layout in-kernel would cost an XLU relayout that outweighs this tiny
    # once-per-step store.
    return jnp.concatenate([s, m2], axis=1)


def _conv1_stats_kernel(x_ref, w_ref, y_ref, st_ref, *, seg_len):
    # Pass 1: conv1 over the pooled input block + per-block BN1 partial stats.
    y = _conv3_replicate(x_ref[...], w_ref[...], seg_len)   # f32 (Cout_p, B_blk*Lh)
    y_ref[...] = y.astype(y_ref.dtype)
    st_ref[0] = _sum_m2(y)


def _bn_relu_conv2_stats_kernel(y1_ref, s_ref, t_ref, w_ref, y_ref, st_ref, *,
                                seg_len):
    # Pass 2: BN1 apply (single f32 FMA) + ReLU + conv2 + per-block BN2 stats.
    h = jnp.maximum(y1_ref[...].astype(jnp.float32) * s_ref[...] + t_ref[...], 0.0)
    y = _conv3_replicate(h.astype(w_ref.dtype), w_ref[...], seg_len)
    y_ref[...] = y.astype(y_ref.dtype)
    st_ref[0] = _sum_m2(y)


# ---------------------------------------------------------------------------
# Plain-JAX glue: layout, padding, tiny O(C) BN folds, VMEM sizing
# ---------------------------------------------------------------------------
def _round_up(v, m):
    return (v + m - 1) // m * m


def _pad_axis(a, target, axis):
    pad = target - a.shape[axis]
    if pad == 0:
        return a
    widths = [(0, 0)] * a.ndim
    widths[axis] = (0, pad)
    return jnp.pad(a, widths)


def _stack_taps(w, cout_p, cin_p):
    """PyTorch Conv1d weight (Co, Ci, 3) -> (Co_p, 3*Ci_p); tap order matches the
    in-kernel [left, center, right] channel stacking."""
    w = _pad_axis(_pad_axis(w, cout_p, 0), cin_p, 1)
    return jnp.concatenate([w[:, :, 0], w[:, :, 1], w[:, :, 2]], axis=1)


def _bn_scale_shift(stats, gamma, beta, count_per_block):
    """Fold per-block (sum, centered-M2) partials + BN affine into per-channel
    (scale, shift) using Chan's parallel-variance combine.  O(C) glue work."""
    nb = stats.shape[0]
    total = nb * count_per_block
    s = stats[:, :, 0]                                   # (nb, C_p)
    m2 = stats[:, :, 1]                                  # (nb, C_p)
    mean_b = s / count_per_block
    mean = jnp.sum(s, axis=0) / total                    # (C_p,)
    m2_tot = jnp.sum(m2, axis=0) + count_per_block * jnp.sum(
        (mean_b - mean[None, :]) ** 2, axis=0)
    var = jnp.maximum(m2_tot / total, 0.0)               # biased (train-mode BN)
    scale = gamma * jax.lax.rsqrt(var + BN_EPS)
    shift = beta - mean * scale
    return scale[:, None], shift[:, None]                # (C_p, 1) each


def _vmem_cap_bytes():
    """Physical VMEM per TensorCore (v5e/v6e: 128 MiB, v7x: 64 MiB).  Falls back
    to the conservative v7x value when no TPU is attached (interpret mode)."""
    try:
        return int(pltpu.get_tpu_info().vmem_capacity_bytes)
    except Exception:  # non-TPU backend / interpret mode
        return 64 << 20


def _pass_vmem_bytes(cin_p, cout_p, lh):
    """Per-batch-element VMEM footprint (bytes) of each pass: double-buffered
    input/output activation blocks + in-kernel temporaries (shifted taps, the
    (3C, L) stacked MXU operand, f32 conv accumulator / BN-applied activations)."""
    p1 = lh * ((2 * cin_p + 2 * cout_p + 5 * cin_p) * _ISZ + 4 * cout_p)
    p2 = lh * ((2 * cout_p + 2 * cout_p + 6 * cout_p) * _ISZ + 8 * cout_p)
    return p1, p2


def _pick_batch_block(n, lh, bytes_per_batch, vmem_budget):
    """Batch elements per grid step: largest divisor of n whose block (a) keeps
    the lane axis a multiple of 128 (or spans the whole batch) and (b) fits the
    VMEM budget.  Prefer >= 2 grid steps (v7x shards 'parallel' grid axes across
    its two TensorCores) as long as each step stays lane-dense (>= 512 lanes,
    ~85% of HBM roofline)."""
    divisors = [d for d in range(1, n + 1) if n % d == 0]
    valid = [d for d in divisors if (d * lh) % 128 == 0 or d == n]
    fitting = [d for d in valid if d * bytes_per_batch <= vmem_budget] or valid[:1]
    b_blk = max(fitting)
    if b_blk == n and n > 1:
        smaller = [d for d in fitting if d <= n // 2 and d * lh >= 512]
        if smaller:
            b_blk = max(smaller)
    return b_blk


def _vmem_limit(step_bytes, vmem_cap):
    """Scoped-VMEM request: per-step footprint + headroom, capped below the
    physical per-core capacity."""
    return int(min(max(step_bytes + (2 << 20), 4 << 20), (vmem_cap * 9) // 10))


@jax.jit
def down_forward(x, w1, b1, g1, be1, w2, b2, g2, be2):
    """Forward of Down(C_in, C_out).  x: (N, C_in, L) NCL.
    w1: (C_out, C_in, 3), w2: (C_out, C_out, 3) (PyTorch Conv1d layout),
    b1/b2: (C_out,) conv biases, g*/be*: (C_out,) BatchNorm affine params."""
    # Conv biases are exactly cancelled by train-mode BN mean subtraction.
    # NOTE: only valid for train-mode BN; re-add for eval/running-stats BN.
    del b1, b2
    n, c_in, L = x.shape
    c_out = w1.shape[0]
    lh = L // 2
    cin_p = _round_up(c_in, _SUBLANE)
    cout_p = _round_up(c_out, _SUBLANE)

    # ---- prologue: ONE fused XLA pass over x --------------------------------
    # MaxPool1d(2) + channel-major relayout (batch folded into the lane axis:
    # xp[c, b*Lh + i] = max(x[b, c, 2i], x[b, c, 2i+1])) + channel pad + cast.
    # TODO(synk): move the even/odd de-interleave in-kernel (strided pl.ds lane
    # loads) if this fused prologue ever shows up in profiles; the relayout/cast
    # pass is needed for the channel-major layout anyway.
    xp = jnp.maximum(x[:, :, 0:2 * lh:2], x[:, :, 1:2 * lh:2])       # (N, Cin, Lh)
    xp = jnp.transpose(xp, (1, 0, 2)).reshape(c_in, n * lh)          # (Cin, N*Lh)
    xp = _pad_axis(xp, cin_p, 0).astype(MXU_DTYPE)

    w1s = _stack_taps(w1, cout_p, cin_p).astype(MXU_DTYPE)           # (Cout_p, 3Cin_p)
    w2s = _stack_taps(w2, cout_p, cout_p).astype(MXU_DTYPE)          # (Cout_p, 3Cout_p)
    g1p, be1p = _pad_axis(g1, cout_p, 0), _pad_axis(be1, cout_p, 0)
    g2p, be2p = _pad_axis(g2, cout_p, 0), _pad_axis(be2, cout_p, 0)

    # ---- batch blocking ------------------------------------------------------
    vmem_cap = _vmem_cap_bytes()
    p1_b, p2_b = _pass_vmem_bytes(cin_p, cout_p, lh)
    b_blk = _pick_batch_block(n, lh, max(p1_b, p2_b), int(0.8 * vmem_cap))
    n_blk = n // b_blk
    lt = b_blk * lh                                  # lanes per grid step

    act_spec = lambda c: pl.BlockSpec((c, lt), lambda b: (0, b))
    stat_spec = pl.BlockSpec((1, cout_p, 2), lambda b: (b, 0, 0))

    def full_spec(a):
        zeros = (0,) * a.ndim
        return pl.BlockSpec(a.shape, lambda b: zeros)

    # ---- pass 1: conv1 + BN1 partial stats -----------------------------------
    y1, st1 = pl.pallas_call(
        functools.partial(_conv1_stats_kernel, seg_len=lh),
        grid=(n_blk,),
        in_specs=[act_spec(cin_p), full_spec(w1s)],
        out_specs=[act_spec(cout_p), stat_spec],
        out_shape=[
            jax.ShapeDtypeStruct((cout_p, n * lh), MXU_DTYPE),
            jax.ShapeDtypeStruct((n_blk, cout_p, 2), jnp.float32),
        ],
        compiler_params=pltpu.CompilerParams(
            dimension_semantics=("parallel",),
            vmem_limit_bytes=_vmem_limit(b_blk * p1_b + w1s.size * _ISZ, vmem_cap),
        ),
        cost_estimate=pl.CostEstimate(
            flops=2 * cout_p * 3 * cin_p * n * lh,
            transcendentals=0,
            bytes_accessed=_ISZ * (cin_p * n * lh + w1s.size + cout_p * n * lh)
                           + 4 * n_blk * cout_p * 2,
        ),
    )(xp, w1s)

    s1, t1 = _bn_scale_shift(st1, g1p, be1p, lt)          # (Cout_p, 1) f32 each

    # ---- pass 2: BN1 apply + ReLU + conv2 + BN2 partial stats ----------------
    y2, st2 = pl.pallas_call(
        functools.partial(_bn_relu_conv2_stats_kernel, seg_len=lh),
        grid=(n_blk,),
        in_specs=[act_spec(cout_p), full_spec(s1), full_spec(t1), full_spec(w2s)],
        out_specs=[act_spec(cout_p), stat_spec],
        out_shape=[
            jax.ShapeDtypeStruct((cout_p, n * lh), MXU_DTYPE),
            jax.ShapeDtypeStruct((n_blk, cout_p, 2), jnp.float32),
        ],
        compiler_params=pltpu.CompilerParams(
            dimension_semantics=("parallel",),
            vmem_limit_bytes=_vmem_limit(b_blk * p2_b + w2s.size * _ISZ, vmem_cap),
        ),
        cost_estimate=pl.CostEstimate(
            flops=2 * cout_p * 3 * cout_p * n * lh,
            transcendentals=0,
            bytes_accessed=_ISZ * (2 * cout_p * n * lh + w2s.size)
                           + 4 * (n_blk * cout_p * 2 + 2 * cout_p),
        ),
    )(y1, s1, t1, w2s)

    s2, t2 = _bn_scale_shift(st2, g2p, be2p, lt)

    # ---- epilogue: ONE fused XLA pass -----------------------------------------
    # BN2 apply + ReLU + layout restore + channel-pad slice.  A third Pallas pass
    # here would only add an extra HBM round trip (pure FMA/ReLU stream).
    out = jnp.maximum(y2.astype(jnp.float32) * s2 + t2, 0.0)         # (Cout_p, N*Lh)
    return out.reshape(cout_p, n, lh).transpose(1, 0, 2)[:, :c_out, :]


# ---------------------------------------------------------------------------
# Pure-JAX reference (mirrors the PyTorch module, incl. conv bias).
# compute_dtype mimics the kernel's MXU-operand / intermediate-storage rounding
# (f32 => exact PyTorch-f32 semantics).
# ---------------------------------------------------------------------------
def _reference_down(x, w1, b1, g1, be1, w2, b2, g2, be2,
                    compute_dtype=jnp.float32):
    lh = x.shape[-1] // 2
    h = jnp.maximum(x[:, :, 0:2 * lh:2], x[:, :, 1:2 * lh:2])        # MaxPool1d(2)

    def conv_bn_relu(h, w, b, g, be):
        L = h.shape[-1]
        hc = h.astype(compute_dtype)
        wc = w.astype(compute_dtype)
        hp = jnp.concatenate([hc[:, :, :1], hc, hc[:, :, -1:]], axis=-1)  # replicate
        y = b[None, :, None].astype(jnp.float32)
        for k in range(KERNEL_SIZE):
            y = y + jnp.einsum("oc,ncl->nol", wc[:, :, k], hp[:, :, k:k + L],
                               preferred_element_type=jnp.float32)
        mean = jnp.mean(y, axis=(0, 2), keepdims=True)
        var = jnp.mean((y - mean) ** 2, axis=(0, 2), keepdims=True)       # biased
        ys = y.astype(compute_dtype).astype(jnp.float32)    # storage rounding
        yn = (ys - mean) * jax.lax.rsqrt(var + BN_EPS)
        return jnp.maximum(g[None, :, None] * yn + be[None, :, None], 0.0)

    h = conv_bn_relu(h, w1, b1, g1, be1)
    return conv_bn_relu(h, w2, b2, g2, be2)


if __name__ == "__main__":
    N, C_IN, C_OUT, L = 2, 4, 8, 256          # small demo; Lh = 128 lane tile

    key = jax.random.PRNGKey(0)
    kx, kw1, kb1, kw2, kb2, kg1, kbe1, kg2, kbe2 = jax.random.split(key, 9)

    x = jax.random.normal(kx, (N, C_IN, L), jnp.float32)
    # PyTorch layouts: Conv1d weight (C_out, C_in, K), bias (C_out,)
    w1 = jax.random.normal(kw1, (C_OUT, C_IN, KERNEL_SIZE), jnp.float32) * 0.3
    b1 = jax.random.normal(kb1, (C_OUT,), jnp.float32) * 0.1
    w2 = jax.random.normal(kw2, (C_OUT, C_OUT, KERNEL_SIZE), jnp.float32) * 0.3
    b2 = jax.random.normal(kb2, (C_OUT,), jnp.float32) * 0.1
    # BatchNorm affine params (randomized around the PyTorch default init so the
    # scale/shift path is actually exercised).
    g1 = 1.0 + 0.1 * jax.random.normal(kg1, (C_OUT,), jnp.float32)
    be1 = 0.1 * jax.random.normal(kbe1, (C_OUT,), jnp.float32)
    g2 = 1.0 + 0.1 * jax.random.normal(kg2, (C_OUT,), jnp.float32)
    be2 = 0.1 * jax.random.normal(kbe2, (C_OUT,), jnp.float32)

    out = jax.block_until_ready(down_forward(x, w1, b1, g1, be1, w2, b2, g2, be2))
    # Reference mirrors PyTorch; with compute_dtype=MXU_DTYPE it also mirrors the
    # kernel's bf16 MXU-operand / intermediate-storage rounding, so the tolerance
    # only absorbs accumulation-order / rounding-point differences (outputs are
    # BN-normalized to O(1), i.e. a few bf16 ulps through two conv+BN layers).
    ref = jax.block_until_ready(
        _reference_down(x, w1, b1, g1, be1, w2, b2, g2, be2,
                        compute_dtype=MXU_DTYPE))

    assert out.shape == (N, C_OUT, L // 2), out.shape
    assert bool(jnp.all(out >= 0.0))                      # ReLU output
    err = float(jnp.max(jnp.abs(out - ref)))
    tol = 1e-3 if MXU_DTYPE == jnp.float32 else 4e-2
    assert err < tol, f"max |kernel - reference| = {err}"
    print("KERNEL_OK")
</pallas_src>

<mosaic_0001>
module attributes {stable_mosaic.version = 11 : i64} {
  func.func @_conv1_stats_kernel(%arg0: i32, %arg1: memref<16x256xbf16, #tpu.memory_space<vmem>>, %arg2: memref<16x48xbf16, #tpu.memory_space<vmem>>, %arg3: memref<16x256xbf16, #tpu.memory_space<vmem>>, %arg4: memref<1x16x2xf32, #tpu.memory_space<vmem>>) attributes {dimension_semantics = [#tpu.dimension_semantics<parallel>], iteration_bounds = array<i64: 1>, scalar_prefetch = 0 : i64, scratch_operands = 0 : i64, tpu.core_type = #tpu.core_type<tc>, window_params = [{transform_indices = @transform_0, window_bounds = array<i64: 16, 256>}, {pipeline_mode = #tpu.pipeline_mode<synchronous>, transform_indices = @transform_1, window_bounds = array<i64: 16, 48>}, {transform_indices = @transform_2, window_bounds = array<i64: 16, 256>}, {transform_indices = @transform_3, window_bounds = array<i64: 1, 16, 2>}]} {
    %c0 = arith.constant 0 : index
    %c0_0 = arith.constant 0 : index
    %0 = vector.load %arg1[%c0, %c0_0] : memref<16x256xbf16, #tpu.memory_space<vmem>>, vector<16x256xbf16>
    %c0_1 = arith.constant 0 : index
    %c0_2 = arith.constant 0 : index
    %1 = vector.load %arg2[%c0_1, %c0_2] : memref<16x48xbf16, #tpu.memory_space<vmem>>, vector<16x48xbf16>
    %2 = tpu.iota {dimensions = array<i32: 1>} : vector<1x256xi32>
    %c128_i32 = arith.constant 128 : i32
    %c0_i32 = arith.constant 0 : i32
    %3 = arith.cmpi eq, %c128_i32, %c0_i32 : i32
    %c1_i32 = arith.constant 1 : i32
    %4 = arith.select %3, %c1_i32, %c128_i32 : i32
    %5 = vector.broadcast %4 : i32 to vector<1x256xi32>
    %6 = arith.remsi %2, %5 : vector<1x256xi32>
    %c0_i32_3 = arith.constant 0 : i32
    %7 = vector.broadcast %c0_i32_3 : i32 to vector<1x256xi32>
    %8 = arith.cmpi ne, %6, %7 : vector<1x256xi32>
    %c0_i32_4 = arith.constant 0 : i32
    %9 = vector.broadcast %c0_i32_4 : i32 to vector<1x256xi32>
    %10 = arith.cmpi slt, %6, %9 : vector<1x256xi32>
    %c0_i32_5 = arith.constant 0 : i32
    %11 = arith.cmpi slt, %4, %c0_i32_5 : i32
    %12 = vector.broadcast %11 : i1 to vector<1x256xi1>
    %13 = vector.broadcast %12 : vector<1x256xi1> to vector<1x256xi1>
    %14 = arith.xori %10, %13 : vector<1x256xi1>
    %15 = arith.andi %14, %8 : vector<1x256xi1>
    %16 = vector.broadcast %4 : i32 to vector<1x256xi32>
    %17 = arith.addi %6, %16 : vector<1x256xi32>
    %18 = arith.select %15, %17, %6 : vector<1x256xi1>, vector<1x256xi32>
    %c0_i32_6 = arith.constant 0 : i32
    %19 = vector.broadcast %c0_i32_6 : i32 to vector<1x256xi32>
    %20 = arith.cmpi eq, %18, %19 : vector<1x256xi32>
    %21 = vector.extract_strided_slice %0 {offsets = [0, 255], sizes = [16, 1], strides = [1, 1]} : vector<16x256xbf16> to vector<16x1xbf16>
    %22 = vector.extract_strided_slice %0 {offsets = [0, 0], sizes = [16, 255], strides = [1, 1]} : vector<16x256xbf16> to vector<16x255xbf16>
    %23 = tpu.concatenate %21, %22 in 1 : vector<16x1xbf16>, vector<16x255xbf16> -> vector<16x256xbf16>
    %24 = vector.shape_cast %20 : vector<1x256xi1> to vector<1x256xi1>
    %25 = vector.broadcast %24 : vector<1x256xi1> to vector<16x256xi1>
    %26 = arith.select %25, %0, %23 : vector<16x256xi1>, vector<16x256xbf16>
    %c127_i32 = arith.constant 127 : i32
    %27 = vector.broadcast %c127_i32 : i32 to vector<1x256xi32>
    %28 = arith.cmpi eq, %18, %27 : vector<1x256xi32>
    %29 = vector.extract_strided_slice %0 {offsets = [0, 1], sizes = [16, 255], strides = [1, 1]} : vector<16x256xbf16> to vector<16x255xbf16>
    %30 = vector.extract_strided_slice %0 {offsets = [0, 0], sizes = [16, 1], strides = [1, 1]} : vector<16x256xbf16> to vector<16x1xbf16>
    %31 = tpu.concatenate %29, %30 in 1 : vector<16x255xbf16>, vector<16x1xbf16> -> vector<16x256xbf16>
    %32 = vector.shape_cast %28 : vector<1x256xi1> to vector<1x256xi1>
    %33 = vector.broadcast %32 : vector<1x256xi1> to vector<16x256xi1>
    %34 = arith.select %33, %0, %31 : vector<16x256xi1>, vector<16x256xbf16>
    %35 = tpu.concatenate %26, %0, %34 in 0 : vector<16x256xbf16>, vector<16x256xbf16>, vector<16x256xbf16> -> vector<48x256xbf16>
    %cst = arith.constant dense<0.000000e+00> : vector<16x256xf32>
    %36 = tpu.matmul %1, %35, %cst {dimension_numbers = #tpu.dot_dimension_numbers<[1], [0], [0], [1], [0, 0, 1, 1], [], []>} : vector<16x48xbf16>, vector<48x256xbf16>, vector<16x256xf32> -> vector<16x256xf32>
    %37 = arith.truncf %36 : vector<16x256xf32> to vector<16x256xbf16>
    %c0_7 = arith.constant 0 : index
    %c0_8 = arith.constant 0 : index
    %38 = vector.load %arg3[%c0_7, %c0_8] : memref<16x256xbf16, #tpu.memory_space<vmem>>, vector<16x256xbf16>
    tpu.vector_store %arg3[%c0_7, %c0_8], %37 {strides = array<i32>} : memref<16x256xbf16, #tpu.memory_space<vmem>>, vector<16x256xbf16>,
    %cst_9 = arith.constant dense<0.000000e+00> : vector<16xf32>
    %39 = vector.multi_reduction <add>, %36, %cst_9 [1] : vector<16x256xf32> to vector<16xf32>
    %40 = vector.shape_cast %39 : vector<16xf32> to vector<16x1xf32>
    %cst_10 = arith.constant 3.906250e-03 : f32
    %41 = vector.broadcast %cst_10 : f32 to vector<16x1xf32>
    %42 = arith.mulf %40, %41 : vector<16x1xf32>
    %43 = vector.broadcast %42 : vector<16x1xf32> to vector<16x256xf32>
    %44 = arith.subf %36, %43 : vector<16x256xf32>
    %45 = arith.mulf %44, %44 : vector<16x256xf32>
    %cst_11 = arith.constant dense<0.000000e+00> : vector<16xf32>
    %46 = vector.multi_reduction <add>, %45, %cst_11 [1] : vector<16x256xf32> to vector<16xf32>
    %47 = vector.shape_cast %46 : vector<16xf32> to vector<16x1xf32>
    %48 = tpu.concatenate %40, %47 in 1 : vector<16x1xf32>, vector<16x1xf32> -> vector<16x2xf32>
    %c0_12 = arith.constant 0 : index
    %c0_13 = arith.constant 0 : index
    %c0_14 = arith.constant 0 : index
    %49 = vector.load %arg4[%c0_12, %c0_13, %c0_14] : memref<1x16x2xf32, #tpu.memory_space<vmem>>, vector<1x16x2xf32>
    %50 = vector.shape_cast %49 : vector<1x16x2xf32> to vector<16x2xf32>
    %51 = vector.shape_cast %48 : vector<16x2xf32> to vector<1x16x2xf32>
    tpu.vector_store %arg4[%c0_12, %c0_13, %c0_14], %51 {strides = array<i32>} : memref<1x16x2xf32, #tpu.memory_space<vmem>>, vector<1x16x2xf32>,
    return
  }
  func.func @transform_0(%arg0: i32) -> (i32, i32) {
    %c0_i32 = arith.constant 0 : i32
    %c0_i32_0 = arith.constant 0 : i32
    return %c0_i32, %arg0 : i32, i32
  }
  func.func @transform_1(%arg0: i32) -> (i32, i32) {
    %c0_i32 = arith.constant 0 : i32
    %c0_i32_0 = arith.constant 0 : i32
    %c0_i32_1 = arith.constant 0 : i32
    return %c0_i32, %c0_i32_0 : i32, i32
  }
  func.func @transform_2(%arg0: i32) -> (i32, i32) {
    %c0_i32 = arith.constant 0 : i32
    %c0_i32_0 = arith.constant 0 : i32
    return %c0_i32, %arg0 : i32, i32
  }
  func.func @transform_3(%arg0: i32) -> (i32, i32, i32) {
    %c0_i32 = arith.constant 0 : i32
    %c0_i32_0 = arith.constant 0 : i32
    %c0_i32_1 = arith.constant 0 : i32
    return %arg0, %c0_i32, %c0_i32_0 : i32, i32, i32
  }
}

module attributes {stable_mosaic.version = 11 : i64} {
  func.func @_bn_relu_conv2_stats_kernel(%arg0: i32, %arg1: memref<16x256xbf16, #tpu.memory_space<vmem>>, %arg2: memref<16x1xf32, #tpu.memory_space<vmem>>, %arg3: memref<16x1xf32, #tpu.memory_space<vmem>>, %arg4: memref<16x48xbf16, #tpu.memory_space<vmem>>, %arg5: memref<16x256xbf16, #tpu.memory_space<vmem>>, %arg6: memref<1x16x2xf32, #tpu.memory_space<vmem>>) attributes {dimension_semantics = [#tpu.dimension_semantics<parallel>], iteration_bounds = array<i64: 1>, scalar_prefetch = 0 : i64, scratch_operands = 0 : i64, tpu.core_type = #tpu.core_type<tc>, window_params = [{transform_indices = @transform_0, window_bounds = array<i64: 16, 256>}, {pipeline_mode = #tpu.pipeline_mode<synchronous>, transform_indices = @transform_1, window_bounds = array<i64: 16, 1>}, {pipeline_mode = #tpu.pipeline_mode<synchronous>, transform_indices = @transform_2, window_bounds = array<i64: 16, 1>}, {pipeline_mode = #tpu.pipeline_mode<synchronous>, transform_indices = @transform_3, window_bounds = array<i64: 16, 48>}, {transform_indices = @transform_4, window_bounds = array<i64: 16, 256>}, {transform_indices = @transform_5, window_bounds = array<i64: 1, 16, 2>}]} {
    %c0 = arith.constant 0 : index
    %c0_0 = arith.constant 0 : index
    %0 = vector.load %arg1[%c0, %c0_0] : memref<16x256xbf16, #tpu.memory_space<vmem>>, vector<16x256xbf16>
    %1 = arith.extf %0 : vector<16x256xbf16> to vector<16x256xf32>
    %c0_1 = arith.constant 0 : index
    %c0_2 = arith.constant 0 : index
    %2 = vector.load %arg2[%c0_1, %c0_2] : memref<16x1xf32, #tpu.memory_space<vmem>>, vector<16x1xf32>
    %3 = vector.broadcast %2 : vector<16x1xf32> to vector<16x256xf32>
    %4 = arith.mulf %1, %3 : vector<16x256xf32>
    %c0_3 = arith.constant 0 : index
    %c0_4 = arith.constant 0 : index
    %5 = vector.load %arg3[%c0_3, %c0_4] : memref<16x1xf32, #tpu.memory_space<vmem>>, vector<16x1xf32>
    %6 = vector.broadcast %5 : vector<16x1xf32> to vector<16x256xf32>
    %7 = arith.addf %4, %6 : vector<16x256xf32>
    %cst = arith.constant 0.000000e+00 : f32
    %8 = vector.broadcast %cst : f32 to vector<16x256xf32>
    %9 = arith.maximumf %7, %8 : vector<16x256xf32>
    %10 = arith.truncf %9 : vector<16x256xf32> to vector<16x256xbf16>
    %c0_5 = arith.constant 0 : index
    %c0_6 = arith.constant 0 : index
    %11 = vector.load %arg4[%c0_5, %c0_6] : memref<16x48xbf16, #tpu.memory_space<vmem>>, vector<16x48xbf16>
    %12 = tpu.iota {dimensions = array<i32: 1>} : vector<1x256xi32>
    %c128_i32 = arith.constant 128 : i32
    %c0_i32 = arith.constant 0 : i32
    %13 = arith.cmpi eq, %c128_i32, %c0_i32 : i32
    %c1_i32 = arith.constant 1 : i32
    %14 = arith.select %13, %c1_i32, %c128_i32 : i32
    %15 = vector.broadcast %14 : i32 to vector<1x256xi32>
    %16 = arith.remsi %12, %15 : vector<1x256xi32>
    %c0_i32_7 = arith.constant 0 : i32
    %17 = vector.broadcast %c0_i32_7 : i32 to vector<1x256xi32>
    %18 = arith.cmpi ne, %16, %17 : vector<1x256xi32>
    %c0_i32_8 = arith.constant 0 : i32
    %19 = vector.broadcast %c0_i32_8 : i32 to vector<1x256xi32>
    %20 = arith.cmpi slt, %16, %19 : vector<1x256xi32>
    %c0_i32_9 = arith.constant 0 : i32
    %21 = arith.cmpi slt, %14, %c0_i32_9 : i32
    %22 = vector.broadcast %21 : i1 to vector<1x256xi1>
    %23 = vector.broadcast %22 : vector<1x256xi1> to vector<1x256xi1>
    %24 = arith.xori %20, %23 : vector<1x256xi1>
    %25 = arith.andi %24, %18 : vector<1x256xi1>
    %26 = vector.broadcast %14 : i32 to vector<1x256xi32>
    %27 = arith.addi %16, %26 : vector<1x256xi32>
    %28 = arith.select %25, %27, %16 : vector<1x256xi1>, vector<1x256xi32>
    %c0_i32_10 = arith.constant 0 : i32
    %29 = vector.broadcast %c0_i32_10 : i32 to vector<1x256xi32>
    %30 = arith.cmpi eq, %28, %29 : vector<1x256xi32>
    %31 = vector.extract_strided_slice %10 {offsets = [0, 255], sizes = [16, 1], strides = [1, 1]} : vector<16x256xbf16> to vector<16x1xbf16>
    %32 = vector.extract_strided_slice %10 {offsets = [0, 0], sizes = [16, 255], strides = [1, 1]} : vector<16x256xbf16> to vector<16x255xbf16>
    %33 = tpu.concatenate %31, %32 in 1 : vector<16x1xbf16>, vector<16x255xbf16> -> vector<16x256xbf16>
    %34 = vector.shape_cast %30 : vector<1x256xi1> to vector<1x256xi1>
    %35 = vector.broadcast %34 : vector<1x256xi1> to vector<16x256xi1>
    %36 = arith.select %35, %10, %33 : vector<16x256xi1>, vector<16x256xbf16>
    %c127_i32 = arith.constant 127 : i32
    %37 = vector.broadcast %c127_i32 : i32 to vector<1x256xi32>
    %38 = arith.cmpi eq, %28, %37 : vector<1x256xi32>
    %39 = vector.extract_strided_slice %10 {offsets = [0, 1], sizes = [16, 255], strides = [1, 1]} : vector<16x256xbf16> to vector<16x255xbf16>
    %40 = vector.extract_strided_slice %10 {offsets = [0, 0], sizes = [16, 1], strides = [1, 1]} : vector<16x256xbf16> to vector<16x1xbf16>
    %41 = tpu.concatenate %39, %40 in 1 : vector<16x255xbf16>, vector<16x1xbf16> -> vector<16x256xbf16>
    %42 = vector.shape_cast %38 : vector<1x256xi1> to vector<1x256xi1>
    %43 = vector.broadcast %42 : vector<1x256xi1> to vector<16x256xi1>
    %44 = arith.select %43, %10, %41 : vector<16x256xi1>, vector<16x256xbf16>
    %45 = tpu.concatenate %36, %10, %44 in 0 : vector<16x256xbf16>, vector<16x256xbf16>, vector<16x256xbf16> -> vector<48x256xbf16>
    %cst_11 = arith.constant dense<0.000000e+00> : vector<16x256xf32>
    %46 = tpu.matmul %11, %45, %cst_11 {dimension_numbers = #tpu.dot_dimension_numbers<[1], [0], [0], [1], [0, 0, 1, 1], [], []>} : vector<16x48xbf16>, vector<48x256xbf16>, vector<16x256xf32> -> vector<16x256xf32>
    %47 = arith.truncf %46 : vector<16x256xf32> to vector<16x256xbf16>
    %c0_12 = arith.constant 0 : index
    %c0_13 = arith.constant 0 : index
    %48 = vector.load %arg5[%c0_12, %c0_13] : memref<16x256xbf16, #tpu.memory_space<vmem>>, vector<16x256xbf16>
    tpu.vector_store %arg5[%c0_12, %c0_13], %47 {strides = array<i32>} : memref<16x256xbf16, #tpu.memory_space<vmem>>, vector<16x256xbf16>,
    %cst_14 = arith.constant dense<0.000000e+00> : vector<16xf32>
    %49 = vector.multi_reduction <add>, %46, %cst_14 [1] : vector<16x256xf32> to vector<16xf32>
    %50 = vector.shape_cast %49 : vector<16xf32> to vector<16x1xf32>
    %cst_15 = arith.constant 3.906250e-03 : f32
    %51 = vector.broadcast %cst_15 : f32 to vector<16x1xf32>
    %52 = arith.mulf %50, %51 : vector<16x1xf32>
    %53 = vector.broadcast %52 : vector<16x1xf32> to vector<16x256xf32>
    %54 = arith.subf %46, %53 : vector<16x256xf32>
    %55 = arith.mulf %54, %54 : vector<16x256xf32>
    %cst_16 = arith.constant dense<0.000000e+00> : vector<16xf32>
    %56 = vector.multi_reduction <add>, %55, %cst_16 [1] : vector<16x256xf32> to vector<16xf32>
    %57 = vector.shape_cast %56 : vector<16xf32> to vector<16x1xf32>
    %58 = tpu.concatenate %50, %57 in 1 : vector<16x1xf32>, vector<16x1xf32> -> vector<16x2xf32>
    %c0_17 = arith.constant 0 : index
    %c0_18 = arith.constant 0 : index
    %c0_19 = arith.constant 0 : index
    %59 = vector.load %arg6[%c0_17, %c0_18, %c0_19] : memref<1x16x2xf32, #tpu.memory_space<vmem>>, vector<1x16x2xf32>
    %60 = vector.shape_cast %59 : vector<1x16x2xf32> to vector<16x2xf32>
    %61 = vector.shape_cast %58 : vector<16x2xf32> to vector<1x16x2xf32>
    tpu.vector_store %arg6[%c0_17, %c0_18, %c0_19], %61 {strides = array<i32>} : memref<1x16x2xf32, #tpu.memory_space<vmem>>, vector<1x16x2xf32>,
    return
  }
  func.func @transform_0(%arg0: i32) -> (i32, i32) {
    %c0_i32 = arith.constant 0 : i32
    %c0_i32_0 = arith.constant 0 : i32
    return %c0_i32, %arg0 : i32, i32
  }
  func.func @transform_1(%arg0: i32) -> (i32, i32) {
    %c0_i32 = arith.constant 0 : i32
    %c0_i32_0 = arith.constant 0 : i32
    %c0_i32_1 = arith.constant 0 : i32
    return %c0_i32, %c0_i32_0 : i32, i32
  }
  func.func @transform_2(%arg0: i32) -> (i32, i32) {
    %c0_i32 = arith.constant 0 : i32
    %c0_i32_0 = arith.constant 0 : i32
    %c0_i32_1 = arith.constant 0 : i32
    return %c0_i32, %c0_i32_0 : i32, i32
  }
  func.func @transform_3(%arg0: i32) -> (i32, i32) {
    %c0_i32 = arith.constant 0 : i32
    %c0_i32_0 = arith.constant 0 : i32
    %c0_i32_1 = arith.constant 0 : i32
    return %c0_i32, %c0_i32_0 : i32, i32
  }
  func.func @transform_4(%arg0: i32) -> (i32, i32) {
    %c0_i32 = arith.constant 0 : i32
    %c0_i32_0 = arith.constant 0 : i32
    return %c0_i32, %arg0 : i32, i32
  }
  func.func @transform_5(%arg0: i32) -> (i32, i32, i32) {
    %c0_i32 = arith.constant 0 : i32
    %c0_i32_0 = arith.constant 0 : i32
    %c0_i32_1 = arith.constant 0 : i32
    return %arg0, %c0_i32, %c0_i32_0 : i32, i32, i32
  }
}

</mosaic_0001>

<llo_original>
// kernel: down_forward.2
$region0: #{down_forward.2}
  #allocation0 [shape = 'u32[]', space=smem, size = 0x4, offset = 0x4, fixed_abs, tag = 'smem constant byte address 0x4 - core index']
  #allocation1 [shape = 'u32[144,128]{1,0:T(1,128)}', space=vmem, size = 0x12000, scoped, tag = 'internal scratch']
  %s0 = inlined_call_operand.vmem [shape: bf16[16,256], index: 0, kind: input, shape index: {}]
  %s1 = inlined_call_operand.vmem [shape: bf16[16,48], index: 1, kind: input, shape index: {}]
  %s2 = inlined_call_operand.vmem [shape: bf16[16,256], index: 2, kind: output, shape index: {0}]
  %s3 = inlined_call_operand.vmem [shape: f32[1,16,2], index: 3, kind: output, shape index: {1}]
  %4 = xla_tuple %s2, %s3
  %s5 = sld [smem:[#allocation0]]
  $region26: #{down_forward.2} parent=0
    _
  %s7 = ssub.s32 1, %s5
  %s8 = scalar_select 0, %s7, %s5
  // Predicated region
  $region2: #{down_forward.2} parent=0 // pred_check
    _
  $region3: #{down_forward.2} parent=0 // pred_check_branch
    %10 = sbr.rel (0) target = $region5
  $region4: #{down_forward.2} parent=0 // pred_region
    _
  $region5: #{down_forward.2} parent=0 // pred_fallthru
    _
  // Predicated region
  $region6: #{down_forward.2} parent=0 // pred_check
    _
  $region7: #{down_forward.2} parent=0 // pred_check_branch
    %12 = sbr.rel (0) target = $region9
  $region8: #{down_forward.2} parent=0 // pred_region
    _
  $region9: #{down_forward.2} parent=0 // pred_fallthru
    _
  %v14 = vld [vmem:[%s0] sm:$0xff]
  %v15 = vld [vmem:[%s0 + $0x8] sm:$0xff]
  %v16 = vld [vmem:[%s1] sm:$0xf]
  %v17 = vld [vmem:[%s1 + $0x4] sm:$0xf]
  %v18 = vlaneseq
  %v19 = vand.u32 %v18, 127
  %v20 = vadd.s32 %v19, 128
  %vm21 = vcmp.lt.s32.totalorder %v19, 0
  %v22 = vsub.s32 0, %v19
  %v23 = vsel %vm21, %v22, %v19
  %v24 = vshrl.u32 %v23, 7
  %v25 = vand.u32 %v23, 127
  %v26 = vsub.s32 0, %v25
  %v27 = vsel %vm21, %v26, %v25
  %vm28 = vcmp.lt.s32.totalorder %v20, 0
  %v29 = vsub.s32 0, %v20
  %v30 = vsel %vm28, %v29, %v20
  %v31 = vshrl.u32 %v30, 7
  %v32 = vand.u32 %v30, 127
  %v33 = vsub.s32 0, %v32
  %v34 = vsel %vm28, %v33, %v32
  %vm35 = vcmp.ne.s32.totalorder %v27, 0
  %vm36 = vcmp.ne.s32.totalorder %v34, 0
  %vm37 = vcmp.lt.s32.totalorder %v27, 0
  %vm38 = vcmp.lt.s32.totalorder %v34, 0
  %vm39 = vmand %vm37, %vm35
  %vm40 = vmand %vm38, %vm36
  %v41 = vadd.s32 %v27, 128
  %v42 = vadd.s32 %v34, 128
  %v43 = vsel %vm39, %v41, %v27
  %v44 = vsel %vm40, %v42, %v34
  %vm45 = vcmp.eq.s32.totalorder %v43, 0
  %vm46 = vcmp.eq.s32.totalorder %v44, 0
  %v49 = vunpack.c.h.b16 %v14
  %v50 = vunpack.c.h.b16 %v15
  %v51 = vpack.c.b16 %v50, %v49
  %52 = vrot.lane.b32.xlu0 %v51, 1
  %v53 = vpop.permute.xlu0 %52
  %v54 = vunpack.c.l.b16 %v14
  %v55 = vunpack.c.l.b16 %v15
  %v56 = vpack.c.b16 %v55, %v54
  %57 = vrot.lane.b32.xlu0 %v56, 1
  %v58 = vpop.permute.xlu0 %57
  %vm59 = vcmask 7168
  %v60 = vsel %vm59, %v58, %v53
  %vm61 = vcmask 7168
  %v64 = vsel %vm61, %v53, %v58
  %v65 = vsel %vm45, 1, 0
  %v66 = vsel %vm46, 1, 0
  %vm67 = vcmp.eq.s32.totalorder %v65, 1
  %vm68 = vcmp.eq.s32.totalorder %v66, 1
  %vm69 = vmpackc.low %vm68, %vm67
  %v71 = vunpack.c.l.b16 %v64
  %v72 = vunpack.c.l.b16 %v60
  %v73 = vunpack.c.h.b16 %v64
  %v74 = vunpack.c.h.b16 %v60
  %v75 = vpack.c.b16 %v72, %v71
  %v76 = vpack.c.b16 %v74, %v73
  %v79 = vsel %vm69, %v14, %v75
  %v80 = vsel %vm69, %v15, %v76
  %vm81 = vcmp.eq.s32.totalorder %v43, 127
  %vm82 = vcmp.eq.s32.totalorder %v44, 127
  %83 = vrot.lane.b32.xlu0 %v56, 127
  %v84 = vpop.permute.xlu0 %83
  %85 = vrot.lane.b32.xlu0 %v51, 127
  %v86 = vpop.permute.xlu0 %85
  %vm87 = vcmask 1039360
  %v88 = vsel %vm87, %v84, %v86
  %vm89 = vcmask 1039360
  %v92 = vsel %vm89, %v86, %v84
  %v93 = vsel %vm81, 1, 0
  %v94 = vsel %vm82, 1, 0
  %vm95 = vcmp.eq.s32.totalorder %v93, 1
  %vm96 = vcmp.eq.s32.totalorder %v94, 1
  %vm97 = vmpackc.low %vm96, %vm95
  %v99 = vunpack.c.l.b16 %v88
  %v100 = vunpack.c.l.b16 %v92
  %v101 = vunpack.c.h.b16 %v88
  %v102 = vunpack.c.h.b16 %v92
  %v103 = vpack.c.b16 %v100, %v99
  %v104 = vpack.c.b16 %v102, %v101
  %v107 = vsel %vm97, %v14, %v103
  %v108 = vsel %vm97, %v15, %v104
  %v111 = vunpack.c.l.b16 %v79
  %v112 = vunpack.c.h.b16 %v79
  %v113 = vunpack.c.l.b16 %v80
  %v114 = vunpack.c.h.b16 %v80
  %v115 = vpack.c.b16 %v113, %v111
  %v116 = vpack.c.b16 %v114, %v112
  %v123 = vunpack.c.l.b16 %v107
  %v124 = vunpack.c.h.b16 %v107
  %v125 = vunpack.c.l.b16 %v108
  %v126 = vunpack.c.h.b16 %v108
  %v127 = vpack.c.b16 %v125, %v123
  %v128 = vpack.c.b16 %v126, %v124
  %v133 = vunpack.c.l.b16 %v16
  %v134 = vunpack.c.l.b16 %v17
  %v135 = vpack.c.b16 %v134, %v133
  %vm136 = vcmask 392192
  %v138 = vsel %vm136, %v135, 0
  %140 = vmatprep.subr.bf16.mxu0 %v116
  %141 = vmatpush1.bf16.msra.mxu0 %v115
  %142 = vmatprep.subr.bf16.mxu0 %v51
  %143 = vmatpush1.bf16.msra.mxu0 %v56
  %144 = vmatprep.subr.bf16.mxu0 %v128
  %145 = vmatpush1.bf16.msra.mxu0 %v127
  %146 = vmatprep.subr.bf16.mxu0 0
  %147 = vmatpush1.bf16.msra.mxu0 0
  %148 = vmatprep.subr.bf16.mxu0 0
  %149 = vmatpush1.bf16.msra.mxu0 0
  %150 = vmatprep.subr.bf16.mxu0 0
  %151 = vmatpush1.bf16.msra.mxu0 0
  %152 = vmatprep.subr.bf16.mxu0 0
  %153 = vmatpush1.bf16.msra.mxu0 0
  %154 = vmatprep.subr.bf16.mxu0 0
  %155 = vmatpush1.bf16.msra.mxu0 0
  %156 = vmatprep.subr.bf16.mxu0 0
  %157 = vmatpush1.bf16.msra.mxu0 0
  %158 = vmatprep.subr.bf16.mxu0 0
  %159 = vmatpush1.bf16.msra.mxu0 0
  %160 = vmatprep.subr.bf16.mxu0 0
  %161 = vmatpush1.bf16.msra.mxu0 0
  %162 = vmatprep.subr.bf16.mxu0 0
  %163 = vmatpush1.bf16.msra.mxu0 0
  %164 = vmatprep.subr.bf16.mxu0 0
  %165 = vmatpush1.bf16.msra.mxu0 0
  %166 = vmatprep.subr.bf16.mxu0 0
  %167 = vmatpush1.bf16.msra.mxu0 0
  %168 = vmatprep.subr.bf16.mxu0 0
  %169 = vmatpush1.bf16.msra.mxu0 0
  %170 = vmatprep.subr.bf16.mxu0 0
  %171 = vmatpush1.bf16.msra.mxu0 0
  %172 = vmatprep.mubr.bf16.mxu0 0
  %173 = vmatmul.mubr.bf16.gmra.mrb[0].mxu0 %v138
  %v174 = vpop.f32.mrb[0].mxu0
  %v175 = vadd.f32 0.0, %v174
  %v176 = vpop.f32.mrb[0].mxu0
  %v177 = vadd.f32 0.0, %v176
  %v178 = vpop.f32.mrb[0].mxu0
  %v179 = vadd.f32 0.0, %v178
  %v180 = vpop.f32.mrb[0].mxu0
  %v181 = vadd.f32 0.0, %v180
  %182 = vdwg.mxu0
  %v183 = vpack.c.bf16 %v179, %v175
  %v184 = vpack.c.bf16 %v181, %v177
  %v187 = vunpack.c.l.b16 %v183
  %v188 = vunpack.c.l.b16 %v184
  %v189 = vunpack.c.h.b16 %v183
  %v190 = vunpack.c.h.b16 %v184
  %v191 = vpack.c.b16 %v188, %v187
  %v192 = vpack.c.b16 %v190, %v189
  %195 = vst [vmem:[%s2] sm:$0xff] %v191
  %196 = vst [vmem:[%s2 + $0x8] sm:$0xff] %v192
  %v197 = vadd.f32 %v175, %v177
  %198 = vadd.xlane.f32.xlu0 %v197
  %v199 = vpop.xlane.xlu0 %198
  %v200 = vadd.f32 %v179, %v181
  %201 = vadd.xlane.f32.xlu0 %v200
  %v202 = vpop.xlane.xlu0 %201
  %v203 = vmul.f32 %v199, 0.00390625
  %v204 = vmul.f32 %v202, 0.00390625
  %v205 = vsub.f32 %v175, %v203
  %v206 = vsub.f32 %v177, %v203
  %v207 = vsub.f32 %v179, %v204
  %v208 = vsub.f32 %v181, %v204
  %v209 = vmul.f32 %v205, %v205
  %v210 = vmul.f32 %v206, %v206
  %v211 = vmul.f32 %v207, %v207
  %v212 = vmul.f32 %v208, %v208
  %v213 = vadd.f32 %v209, %v210
  %214 = vadd.xlane.f32.xlu0 %v213
  %v215 = vpop.xlane.xlu0 %214
  %v216 = vadd.f32 %v211, %v212
  %217 = vadd.xlane.f32.xlu0 %v216
  %v218 = vpop.xlane.xlu0 %217
  %v219 = vsel %vm61, %v199, %v215
  %v220 = vsel %vm61, %v202, %v218
  %vm221 = vcmask 15360
  %222 = vst.msk [vmem:[%s3] sm:$0xff] %vm221, %v219
  %223 = vst.msk [vmem:[%s3 + $0x8] sm:$0xff] %vm221, %v220
  // Predicated region
  $region10: #{down_forward.2} parent=0 // pred_check
    _
  $region11: #{down_forward.2} parent=0 // pred_check_branch
    %225 = sbr.rel (0) target = $region13
  $region12: #{down_forward.2} parent=0 // pred_region
    _
  $region13: #{down_forward.2} parent=0 // pred_fallthru
    _
  // Predicated region
  $region14: #{down_forward.2} parent=0 // pred_check
    _
  $region15: #{down_forward.2} parent=0 // pred_check_branch
    %227 = sbr.rel (0) target = $region17
  $region16: #{down_forward.2} parent=0 // pred_region
    _
  $region17: #{down_forward.2} parent=0 // pred_fallthru
    _
  // Predicated region
  $region18: #{down_forward.2} parent=0 // pred_check
    _
  $region19: #{down_forward.2} parent=0 // pred_check_branch
    %229 = sbr.rel (0) target = $region21
  $region20: #{down_forward.2} parent=0 // pred_region
    _
  $region21: #{down_forward.2} parent=0 // pred_fallthru
    _
  // Predicated region
  $region22: #{down_forward.2} parent=0 // pred_check
    _
  $region23: #{down_forward.2} parent=0 // pred_check_branch
    %231 = sbr.rel (0) target = $region25
  $region24: #{down_forward.2} parent=0 // pred_region
    _
  $region25: #{down_forward.2} parent=0 // pred_fallthru
    _

// kernel: down_forward.3
$region0: #{down_forward.3}
  #allocation0 [shape = 'u32[]', space=smem, size = 0x4, offset = 0x4, fixed_abs, tag = 'smem constant byte address 0x4 - core index']
  #allocation1 [shape = 'u32[144,128]{1,0:T(1,128)}', space=vmem, size = 0x12000, scoped, tag = 'internal scratch']
  %s0 = inlined_call_operand.vmem [shape: bf16[16,256], index: 0, kind: input, shape index: {}]
  %s1 = inlined_call_operand.vmem [shape: f32[16,1], index: 1, kind: input, shape index: {}]
  %s2 = inlined_call_operand.vmem [shape: f32[16,1], index: 2, kind: input, shape index: {}]
  %s3 = inlined_call_operand.vmem [shape: bf16[16,48], index: 3, kind: input, shape index: {}]
  %s4 = inlined_call_operand.vmem [shape: bf16[16,256], index: 4, kind: output, shape index: {0}]
  %s5 = inlined_call_operand.vmem [shape: f32[1,16,2], index: 5, kind: output, shape index: {1}]
  %6 = xla_tuple %s4, %s5
  %s7 = sld [smem:[#allocation0]]
  $region34: #{down_forward.3} parent=0
    _
  %s9 = ssub.s32 1, %s7
  %s10 = scalar_select 0, %s9, %s7
  // Predicated region
  $region2: #{down_forward.3} parent=0 // pred_check
    _
  $region3: #{down_forward.3} parent=0 // pred_check_branch
    %12 = sbr.rel (0) target = $region5
  $region4: #{down_forward.3} parent=0 // pred_region
    _
  $region5: #{down_forward.3} parent=0 // pred_fallthru
    _
  // Predicated region
  $region6: #{down_forward.3} parent=0 // pred_check
    _
  $region7: #{down_forward.3} parent=0 // pred_check_branch
    %14 = sbr.rel (0) target = $region9
  $region8: #{down_forward.3} parent=0 // pred_region
    _
  $region9: #{down_forward.3} parent=0 // pred_fallthru
    _
  // Predicated region
  $region10: #{down_forward.3} parent=0 // pred_check
    _
  $region11: #{down_forward.3} parent=0 // pred_check_branch
    %16 = sbr.rel (0) target = $region13
  $region12: #{down_forward.3} parent=0 // pred_region
    _
  $region13: #{down_forward.3} parent=0 // pred_fallthru
    _
  // Predicated region
  $region14: #{down_forward.3} parent=0 // pred_check
    _
  $region15: #{down_forward.3} parent=0 // pred_check_branch
    %18 = sbr.rel (0) target = $region17
  $region16: #{down_forward.3} parent=0 // pred_region
    _
  $region17: #{down_forward.3} parent=0 // pred_fallthru
    _
  %v22 = vld [vmem:[%s0] sm:$0xff]
  %v23 = vld [vmem:[%s0 + $0x8] sm:$0xff]
  %v24 = vunpack.c.l.bf16 %v22
  %v25 = vunpack.c.h.bf16 %v22
  %v26 = vunpack.c.l.bf16 %v23
  %v27 = vunpack.c.h.bf16 %v23
  %v28 = vld [vmem:[%s1] sm:$0xff]
  %v29 = vld [vmem:[%s1 + $0x8] sm:$0xff]
  %31 = vset.pattern.permute.xlu0 0
  %32 = vperm.xlu0 %31, %v28
  %v33 = vpop.permute.xlu0 %32
  %36 = vset.pattern.permute.xlu0 0
  %37 = vperm.xlu0 %36, %v29
  %v38 = vpop.permute.xlu0 %37
  %v40 = vmul.f32 %v24, %v33
  %v41 = vmul.f32 %v25, %v33
  %v42 = vmul.f32 %v26, %v38
  %v43 = vmul.f32 %v27, %v38
  %v44 = vld [vmem:[%s2] sm:$0xff]
  %v45 = vld [vmem:[%s2 + $0x8] sm:$0xff]
  %47 = vset.pattern.permute.xlu0 0
  %48 = vperm.xlu0 %47, %v44
  %v49 = vpop.permute.xlu0 %48
  %52 = vset.pattern.permute.xlu0 0
  %53 = vperm.xlu0 %52, %v45
  %v54 = vpop.permute.xlu0 %53
  %v56 = vadd.f32 %v40, %v49
  %v57 = vadd.f32 %v41, %v49
  %v58 = vadd.f32 %v42, %v54
  %v59 = vadd.f32 %v43, %v54
  %v60 = vmax.f32 %v56, 0.0
  %v61 = vmax.f32 %v57, 0.0
  %v62 = vmax.f32 %v58, 0.0
  %v63 = vmax.f32 %v59, 0.0
  %v64 = vpack.c.bf16 %v62, %v60
  %v65 = vpack.c.bf16 %v63, %v61
  %v66 = vld [vmem:[%s3] sm:$0xf]
  %v67 = vld [vmem:[%s3 + $0x4] sm:$0xf]
  %v68 = vlaneseq
  %v69 = vand.u32 %v68, 127
  %v70 = vadd.s32 %v69, 128
  %vm71 = vcmp.lt.s32.totalorder %v69, 0
  %v72 = vsub.s32 0, %v69
  %v73 = vsel %vm71, %v72, %v69
  %v74 = vshrl.u32 %v73, 7
  %v75 = vand.u32 %v73, 127
  %v76 = vsub.s32 0, %v75
  %v77 = vsel %vm71, %v76, %v75
  %vm78 = vcmp.lt.s32.totalorder %v70, 0
  %v79 = vsub.s32 0, %v70
  %v80 = vsel %vm78, %v79, %v70
  %v81 = vshrl.u32 %v80, 7
  %v82 = vand.u32 %v80, 127
  %v83 = vsub.s32 0, %v82
  %v84 = vsel %vm78, %v83, %v82
  %vm85 = vcmp.ne.s32.totalorder %v77, 0
  %vm86 = vcmp.ne.s32.totalorder %v84, 0
  %vm87 = vcmp.lt.s32.totalorder %v77, 0
  %vm88 = vcmp.lt.s32.totalorder %v84, 0
  %vm89 = vmand %vm87, %vm85
  %vm90 = vmand %vm88, %vm86
  %v91 = vadd.s32 %v77, 128
  %v92 = vadd.s32 %v84, 128
  %v93 = vsel %vm89, %v91, %v77
  %v94 = vsel %vm90, %v92, %v84
  %vm95 = vcmp.eq.s32.totalorder %v93, 0
  %vm96 = vcmp.eq.s32.totalorder %v94, 0
  %98 = vrot.lane.b32.xlu0 %v65, 1
  %v99 = vpop.permute.xlu0 %98
  %101 = vrot.lane.b32.xlu0 %v64, 1
  %v102 = vpop.permute.xlu0 %101
  %vm103 = vcmask 7168
  %v104 = vsel %vm103, %v102, %v99
  %vm106 = vcmask 7168
  %v109 = vsel %vm106, %v99, %v102
  %v111 = vsel %vm95, 1, 0
  %v112 = vsel %vm96, 1, 0
  %vm113 = vcmp.eq.s32.totalorder %v111, 1
  %vm114 = vcmp.eq.s32.totalorder %v112, 1
  %vm115 = vmpackc.low %vm114, %vm113
  %v116 = vsel %vm115, 65537, 0
  %v117 = vlaneseq
  %v118 = vshrl.u32 %v117, 7
  %v119 = vsub.s32 0, %v118
  %v120 = vrot.slane %v116, %v119
  %v121 = vlaneseq
  %v122 = vshrl.u32 %v121, 7
  %v123 = vsub.s32 4, %v122
  %v124 = vrot.slane %v116, %v123
  %vm125 = vcmp.ne.s16.totalorder %v120, 0
  %vm126 = vcmp.ne.s16.totalorder %v124, 0
  %v127 = vsel %vm125, %v64, %v109
  %v128 = vsel %vm126, %v65, %v104
  %vm129 = vcmp.eq.s32.totalorder %v93, 127
  %vm130 = vcmp.eq.s32.totalorder %v94, 127
  %131 = vrot.lane.b32.xlu0 %v64, 127
  %v132 = vpop.permute.xlu0 %131
  %133 = vrot.lane.b32.xlu0 %v65, 127
  %v134 = vpop.permute.xlu0 %133
  %vm135 = vcmask 1039360
  %v136 = vsel %vm135, %v132, %v134
  %vm138 = vcmask 1039360
  %v141 = vsel %vm138, %v134, %v132
  %v143 = vsel %vm129, 1, 0
  %v144 = vsel %vm130, 1, 0
  %vm145 = vcmp.eq.s32.totalorder %v143, 1
  %vm146 = vcmp.eq.s32.totalorder %v144, 1
  %vm147 = vmpackc.low %vm146, %vm145
  %v148 = vsel %vm147, 65537, 0
  %v149 = vlaneseq
  %v150 = vshrl.u32 %v149, 7
  %v151 = vsub.s32 0, %v150
  %v152 = vrot.slane %v148, %v151
  %v153 = vlaneseq
  %v154 = vshrl.u32 %v153, 7
  %v155 = vsub.s32 4, %v154
  %v156 = vrot.slane %v148, %v155
  %vm157 = vcmp.ne.s16.totalorder %v152, 0
  %vm158 = vcmp.ne.s16.totalorder %v156, 0
  %v159 = vsel %vm157, %v64, %v136
  %v160 = vsel %vm158, %v65, %v141
  %v163 = vunpack.c.l.b16 %v66
  %v164 = vunpack.c.l.b16 %v67
  %v165 = vpack.c.b16 %v164, %v163
  %vm166 = vcmask 392192
  %v168 = vsel %vm166, %v165, 0
  %170 = vmatprep.subr.bf16.mxu0 %v128
  %171 = vmatpush1.bf16.msra.mxu0 %v127
  %172 = vmatprep.subr.bf16.mxu0 %v65
  %173 = vmatpush1.bf16.msra.mxu0 %v64
  %174 = vmatprep.subr.bf16.mxu0 %v160
  %175 = vmatpush1.bf16.msra.mxu0 %v159
  %176 = vmatprep.subr.bf16.mxu0 0
  %177 = vmatpush1.bf16.msra.mxu0 0
  %178 = vmatprep.subr.bf16.mxu0 0
  %179 = vmatpush1.bf16.msra.mxu0 0
  %180 = vmatprep.subr.bf16.mxu0 0
  %181 = vmatpush1.bf16.msra.mxu0 0
  %182 = vmatprep.subr.bf16.mxu0 0
  %183 = vmatpush1.bf16.msra.mxu0 0
  %184 = vmatprep.subr.bf16.mxu0 0
  %185 = vmatpush1.bf16.msra.mxu0 0
  %186 = vmatprep.subr.bf16.mxu0 0
  %187 = vmatpush1.bf16.msra.mxu0 0
  %188 = vmatprep.subr.bf16.mxu0 0
  %189 = vmatpush1.bf16.msra.mxu0 0
  %190 = vmatprep.subr.bf16.mxu0 0
  %191 = vmatpush1.bf16.msra.mxu0 0
  %192 = vmatprep.subr.bf16.mxu0 0
  %193 = vmatpush1.bf16.msra.mxu0 0
  %194 = vmatprep.subr.bf16.mxu0 0
  %195 = vmatpush1.bf16.msra.mxu0 0
  %196 = vmatprep.subr.bf16.mxu0 0
  %197 = vmatpush1.bf16.msra.mxu0 0
  %198 = vmatprep.subr.bf16.mxu0 0
  %199 = vmatpush1.bf16.msra.mxu0 0
  %200 = vmatprep.subr.bf16.mxu0 0
  %201 = vmatpush1.bf16.msra.mxu0 0
  %202 = vmatprep.mubr.bf16.mxu0 0
  %203 = vmatmul.mubr.bf16.gmra.mrb[0].mxu0 %v168
  %v204 = vpop.f32.mrb[0].mxu0
  %v205 = vadd.f32 0.0, %v204
  %v206 = vpop.f32.mrb[0].mxu0
  %v207 = vadd.f32 0.0, %v206
  %v208 = vpop.f32.mrb[0].mxu0
  %v209 = vadd.f32 0.0, %v208
  %v210 = vpop.f32.mrb[0].mxu0
  %v211 = vadd.f32 0.0, %v210
  %212 = vdwg.mxu0
  %v213 = vpack.c.bf16 %v209, %v205
  %v214 = vpack.c.bf16 %v211, %v207
  %v217 = vunpack.c.l.b16 %v213
  %v218 = vunpack.c.l.b16 %v214
  %v219 = vunpack.c.h.b16 %v213
  %v220 = vunpack.c.h.b16 %v214
  %v221 = vpack.c.b16 %v218, %v217
  %v222 = vpack.c.b16 %v220, %v219
  %225 = vst [vmem:[%s4] sm:$0xff] %v221
  %226 = vst [vmem:[%s4 + $0x8] sm:$0xff] %v222
  %v227 = vadd.f32 %v205, %v207
  %228 = vadd.xlane.f32.xlu0 %v227
  %v229 = vpop.xlane.xlu0 %228
  %v230 = vadd.f32 %v209, %v211
  %231 = vadd.xlane.f32.xlu0 %v230
  %v232 = vpop.xlane.xlu0 %231
  %v233 = vmul.f32 %v229, 0.00390625
  %v234 = vmul.f32 %v232, 0.00390625
  %v235 = vsub.f32 %v205, %v233
  %v236 = vsub.f32 %v207, %v233
  %v237 = vsub.f32 %v209, %v234
  %v238 = vsub.f32 %v211, %v234
  %v239 = vmul.f32 %v235, %v235
  %v240 = vmul.f32 %v236, %v236
  %v241 = vmul.f32 %v237, %v237
  %v242 = vmul.f32 %v238, %v238
  %v243 = vadd.f32 %v239, %v240
  %244 = vadd.xlane.f32.xlu0 %v243
  %v245 = vpop.xlane.xlu0 %244
  %v246 = vadd.f32 %v241, %v242
  %247 = vadd.xlane.f32.xlu0 %v246
  %v248 = vpop.xlane.xlu0 %247
  %v249 = vsel %vm106, %v229, %v245
  %v250 = vsel %vm106, %v232, %v248
  %vm251 = vcmask 15360
  %252 = vst.msk [vmem:[%s5] sm:$0xff] %vm251, %v249
  %253 = vst.msk [vmem:[%s5 + $0x8] sm:$0xff] %vm251, %v250
  // Predicated region
  $region18: #{down_forward.3} parent=0 // pred_check
    _
  $region19: #{down_forward.3} parent=0 // pred_check_branch
    %255 = sbr.rel (0) target = $region21
  $region20: #{down_forward.3} parent=0 // pred_region
    _
  $region21: #{down_forward.3} parent=0 // pred_fallthru
    _
  // Predicated region
  $region22: #{down_forward.3} parent=0 // pred_check
    _
  $region23: #{down_forward.3} parent=0 // pred_check_branch
    %257 = sbr.rel (0) target = $region25
  $region24: #{down_forward.3} parent=0 // pred_region
    _
  $region25: #{down_forward.3} parent=0 // pred_fallthru
    _
  // Predicated region
  $region26: #{down_forward.3} parent=0 // pred_check
    _
  $region27: #{down_forward.3} parent=0 // pred_check_branch
    %259 = sbr.rel (0) target = $region29
  $region28: #{down_forward.3} parent=0 // pred_region
    _
  $region29: #{down_forward.3} parent=0 // pred_fallthru
    _
  // Predicated region
  $region30: #{down_forward.3} parent=0 // pred_check
    _
  $region31: #{down_forward.3} parent=0 // pred_check_branch
    %261 = sbr.rel (0) target = $region33
  $region32: #{down_forward.3} parent=0 // pred_region
    _
  $region33: #{down_forward.3} parent=0 // pred_fallthru
    _

</llo_original>
